<compile_context>
chip_gen: v5e
topology: v5e:2x2
jax: 0.10.0
libtpu: 0.0.40
codegen_flags: <defaults>
</compile_context>

<pallas_src>
import functools

import jax
import jax.numpy as jnp
from jax import lax
from jax.experimental import pallas as pl
from jax.experimental.pallas import tpu as pltpu


def _cablock_kernel(x_ref, y_ref, gx_ref, bx_ref, gy_ref, by_ref,
                    wq_ref, wkv_ref, bkv_ref, wp_ref, bp_ref, o_ref,
                    *, heads, dim_head, eps):
    """One (batch, query-tile) element per grid step.

    x_ref   : (1, TN, D)        query tokens (already channel-last)
    y_ref   : (1, M, CD)        context tokens
    gx/bx   : (1, D)            LayerNorm(x) affine
    gy/by   : (1, CD)           LayerNorm(y) affine
    wq_ref  : (D, H*DH)
    wkv_ref : (CD, 2*H*DH)      [Wk | Wv] fused
    bkv_ref : (1, 2*H*DH)       [0  | bv] fused
    wp_ref  : (H*DH, D)
    bp_ref  : (1, D)
    o_ref   : (1, TN, D)
    """
    x = x_ref[0].astype(jnp.float32)          # (TN, D)
    y = y_ref[0].astype(jnp.float32)          # (M, CD)

    # LayerNorm (biased variance, eps=1e-5 -> matches torch.nn.LayerNorm)
    mx = jnp.mean(x, axis=-1, keepdims=True)
    vx = jnp.mean(jnp.square(x - mx), axis=-1, keepdims=True)
    xn = (x - mx) * lax.rsqrt(vx + eps) * gx_ref[...] + bx_ref[...]

    my = jnp.mean(y, axis=-1, keepdims=True)
    vy = jnp.mean(jnp.square(y - my), axis=-1, keepdims=True)
    yn = (y - my) * lax.rsqrt(vy + eps) * gy_ref[...] + by_ref[...]

    hdh = heads * dim_head
    # Fused projections: one MXU matmul for Q, one for K|V (bias in epilogue).
    q = jnp.dot(xn, wq_ref[...], preferred_element_type=jnp.float32)                 # (TN, H*DH)
    kv = jnp.dot(yn, wkv_ref[...], preferred_element_type=jnp.float32) + bkv_ref[...]  # (M, 2*H*DH)

    scale = float(dim_head) ** -0.5
    dn = (((1,), (1,)), ((), ()))   # contract last dims: q @ k^T without an explicit transpose
    outs = []
    for h in range(heads):          # static unroll over heads
        qh = q[:, h * dim_head:(h + 1) * dim_head]                    # (TN, DH)
        kh = kv[:, h * dim_head:(h + 1) * dim_head]                   # (M, DH)
        vh = kv[:, hdh + h * dim_head: hdh + (h + 1) * dim_head]      # (M, DH)
        s = lax.dot_general(qh, kh, dn, preferred_element_type=jnp.float32) * scale  # (TN, M)
        s = s - jnp.max(s, axis=-1, keepdims=True)
        p = jnp.exp(s)
        p = p / jnp.sum(p, axis=-1, keepdims=True)
        outs.append(jnp.dot(p, vh, preferred_element_type=jnp.float32))              # (TN, DH)
    attn_out = jnp.concatenate(outs, axis=-1) if heads > 1 else outs[0]               # (TN, H*DH)

    out = jnp.dot(attn_out, wp_ref[...], preferred_element_type=jnp.float32) + bp_ref[...]
    o_ref[0] = (xn + out).astype(o_ref.dtype)   # residual adds the LayerNormed x (as in the module)


def cablock_forward(x, y, params, *, heads, dim_head, channel_last=False, eps=1e-5):
    """Forward of CABlock(dim, context_dim, heads, dim_head).

    x: (B, dim, *spatial) if channel_last=False, else (B, N, dim)
    y: (B, M, context_dim)
    Returns (B, N, dim) — the default (channel_last=False) PyTorch path does NOT
    reshape back to the spatial layout.
    """
    if not channel_last:
        b, c = x.shape[:2]
        x = x.reshape(b, c, -1).transpose(0, 2, 1)        # (B, N, dim)
    # TODO(synk): the original module's channel_last=True output-reshape branch references
    # variables (b, c, ls) that are undefined on that path; it is not reproduced here.

    B, N, D = x.shape
    _, M, CD = y.shape
    hdh = heads * dim_head

    gx = params["gx"].reshape(1, D)
    bx = params["bx"].reshape(1, D)
    gy = params["gy"].reshape(1, CD)
    by = params["by"].reshape(1, CD)
    wq = params["wq"]                                                  # (D, H*DH)
    wkv = jnp.concatenate([params["wk"], params["wv"]], axis=1)        # (CD, 2*H*DH)
    bkv = jnp.concatenate(
        [jnp.zeros((hdh,), params["bv"].dtype), params["bv"]]).reshape(1, 2 * hdh)
    wp = params["wp"]                                                  # (H*DH, D)
    bp = params["bp"].reshape(1, D)

    # Query-row tiling keeps per-step VMEM small for long sequences; for the small
    # test sizes this collapses to a single tile per batch element.
    tn = 128 if (N > 128 and N % 128 == 0) else N
    grid = (B, N // tn)

    kern = functools.partial(_cablock_kernel, heads=heads, dim_head=dim_head, eps=eps)

    out = pl.pallas_call(
        kern,
        out_shape=jax.ShapeDtypeStruct((B, N, D), x.dtype),
        grid=grid,
        in_specs=[
            pl.BlockSpec((1, tn, D), lambda b, i: (b, i, 0)),
            pl.BlockSpec((1, M, CD), lambda b, i: (b, 0, 0)),
            pl.BlockSpec((1, D), lambda b, i: (0, 0)),
            pl.BlockSpec((1, D), lambda b, i: (0, 0)),
            pl.BlockSpec((1, CD), lambda b, i: (0, 0)),
            pl.BlockSpec((1, CD), lambda b, i: (0, 0)),
            pl.BlockSpec((D, hdh), lambda b, i: (0, 0)),
            pl.BlockSpec((CD, 2 * hdh), lambda b, i: (0, 0)),
            pl.BlockSpec((1, 2 * hdh), lambda b, i: (0, 0)),
            pl.BlockSpec((hdh, D), lambda b, i: (0, 0)),
            pl.BlockSpec((1, D), lambda b, i: (0, 0)),
        ],
        out_specs=pl.BlockSpec((1, tn, D), lambda b, i: (b, i, 0)),
        compiler_params=pltpu.CompilerParams(
            dimension_semantics=("parallel", "parallel")),
    )(x, y, gx, bx, gy, by, wq, wkv, bkv, wp, bp)
    return out


if __name__ == "__main__":
    key = jax.random.PRNGKey(0)
    ks = jax.random.split(key, 12)

    B, dim, context_dim, heads, dim_head = 2, 32, 16, 2, 8
    H = W = 4                      # spatial -> N = 16 query tokens
    M = 8                          # context tokens
    hdh = heads * dim_head

    x = jax.random.normal(ks[0], (B, dim, H, W), jnp.float32)
    y = jax.random.normal(ks[1], (B, M, context_dim), jnp.float32)

    params = dict(
        gx=1.0 + 0.1 * jax.random.normal(ks[2], (dim,), jnp.float32),
        bx=0.1 * jax.random.normal(ks[3], (dim,), jnp.float32),
        gy=1.0 + 0.1 * jax.random.normal(ks[4], (context_dim,), jnp.float32),
        by=0.1 * jax.random.normal(ks[5], (context_dim,), jnp.float32),
        wq=0.1 * jax.random.normal(ks[6], (dim, hdh), jnp.float32),
        wk=0.1 * jax.random.normal(ks[7], (context_dim, hdh), jnp.float32),
        wv=0.1 * jax.random.normal(ks[8], (context_dim, hdh), jnp.float32),
        bv=0.1 * jax.random.normal(ks[9], (hdh,), jnp.float32),
        wp=0.1 * jax.random.normal(ks[10], (hdh, dim), jnp.float32),
        bp=0.1 * jax.random.normal(ks[11], (dim,), jnp.float32),
    )

    out = jax.block_until_ready(
        cablock_forward(x, y, params, heads=heads, dim_head=dim_head))

    # Pure-JAX reference of the exact PyTorch forward (channel_last=False path).
    def ln(t, g, b, eps=1e-5):
        m = jnp.mean(t, axis=-1, keepdims=True)
        v = jnp.mean(jnp.square(t - m), axis=-1, keepdims=True)
        return (t - m) / jnp.sqrt(v + eps) * g + b

    xf = x.reshape(B, dim, -1).transpose(0, 2, 1)        # (B, N, dim)
    xn = ln(xf, params["gx"], params["bx"])
    yn = ln(y, params["gy"], params["by"])
    q = xn @ params["wq"]
    k = yn @ params["wk"]
    v = yn @ params["wv"] + params["bv"]

    def split(t):
        return t.reshape(t.shape[0], t.shape[1], heads, dim_head).transpose(0, 2, 1, 3)

    attn = jnp.einsum("bhid,bhjd->bhij", split(q), split(k)) * (dim_head ** -0.5)
    attn = jax.nn.softmax(attn, axis=-1)
    o = jnp.einsum("bhij,bhjd->bhid", attn, split(v))
    o = o.transpose(0, 2, 1, 3).reshape(B, -1, hdh)
    ref = xn + (o @ params["wp"] + params["bp"])

    assert out.shape == (B, H * W, dim), out.shape
    err = float(jnp.max(jnp.abs(out - ref)))
    assert jnp.allclose(out, ref, rtol=1e-4, atol=1e-4), err
    print("KERNEL_OK")
</pallas_src>

<mosaic_0001>
module attributes {stable_mosaic.version = 11 : i64} {
  func.func @_cablock_kernel(%arg0: i32, %arg1: i32, %arg2: memref<1x16x32xf32, #tpu.memory_space<vmem>>, %arg3: memref<1x8x16xf32, #tpu.memory_space<vmem>>, %arg4: memref<1x32xf32, #tpu.memory_space<vmem>>, %arg5: memref<1x32xf32, #tpu.memory_space<vmem>>, %arg6: memref<1x16xf32, #tpu.memory_space<vmem>>, %arg7: memref<1x16xf32, #tpu.memory_space<vmem>>, %arg8: memref<32x16xf32, #tpu.memory_space<vmem>>, %arg9: memref<16x32xf32, #tpu.memory_space<vmem>>, %arg10: memref<1x32xf32, #tpu.memory_space<vmem>>, %arg11: memref<16x32xf32, #tpu.memory_space<vmem>>, %arg12: memref<1x32xf32, #tpu.memory_space<vmem>>, %arg13: memref<1x16x32xf32, #tpu.memory_space<vmem>>) attributes {dimension_semantics = [#tpu.dimension_semantics<parallel>, #tpu.dimension_semantics<parallel>], iteration_bounds = array<i64: 2, 1>, scalar_prefetch = 0 : i64, scratch_operands = 0 : i64, tpu.core_type = #tpu.core_type<tc>, window_params = [{transform_indices = @transform_0, window_bounds = array<i64: 1, 16, 32>}, {transform_indices = @transform_1, window_bounds = array<i64: 1, 8, 16>}, {pipeline_mode = #tpu.pipeline_mode<synchronous>, transform_indices = @transform_2, window_bounds = array<i64: 1, 32>}, {pipeline_mode = #tpu.pipeline_mode<synchronous>, transform_indices = @transform_3, window_bounds = array<i64: 1, 32>}, {pipeline_mode = #tpu.pipeline_mode<synchronous>, transform_indices = @transform_4, window_bounds = array<i64: 1, 16>}, {pipeline_mode = #tpu.pipeline_mode<synchronous>, transform_indices = @transform_5, window_bounds = array<i64: 1, 16>}, {pipeline_mode = #tpu.pipeline_mode<synchronous>, transform_indices = @transform_6, window_bounds = array<i64: 32, 16>}, {pipeline_mode = #tpu.pipeline_mode<synchronous>, transform_indices = @transform_7, window_bounds = array<i64: 16, 32>}, {pipeline_mode = #tpu.pipeline_mode<synchronous>, transform_indices = @transform_8, window_bounds = array<i64: 1, 32>}, {pipeline_mode = #tpu.pipeline_mode<synchronous>, transform_indices = @transform_9, window_bounds = array<i64: 16, 32>}, {pipeline_mode = #tpu.pipeline_mode<synchronous>, transform_indices = @transform_10, window_bounds = array<i64: 1, 32>}, {transform_indices = @transform_11, window_bounds = array<i64: 1, 16, 32>}]} {
    %c0 = arith.constant 0 : index
    %c0_0 = arith.constant 0 : index
    %c0_1 = arith.constant 0 : index
    %0 = vector.load %arg2[%c0, %c0_0, %c0_1] : memref<1x16x32xf32, #tpu.memory_space<vmem>>, vector<1x16x32xf32>
    %1 = vector.shape_cast %0 : vector<1x16x32xf32> to vector<16x32xf32>
    %c0_2 = arith.constant 0 : index
    %c0_3 = arith.constant 0 : index
    %c0_4 = arith.constant 0 : index
    %2 = vector.load %arg3[%c0_2, %c0_3, %c0_4] : memref<1x8x16xf32, #tpu.memory_space<vmem>>, vector<1x8x16xf32>
    %3 = vector.shape_cast %2 : vector<1x8x16xf32> to vector<8x16xf32>
    %cst = arith.constant dense<0.000000e+00> : vector<16xf32>
    %4 = vector.multi_reduction <add>, %1, %cst [1] : vector<16x32xf32> to vector<16xf32>
    %5 = vector.shape_cast %4 : vector<16xf32> to vector<16x1xf32>
    %cst_5 = arith.constant 3.200000e+01 : f32
    %6 = vector.broadcast %cst_5 : f32 to vector<16x1xf32>
    %7 = arith.divf %5, %6 : vector<16x1xf32>
    %8 = vector.broadcast %7 : vector<16x1xf32> to vector<16x32xf32>
    %9 = arith.subf %1, %8 : vector<16x32xf32>
    %10 = arith.mulf %9, %9 : vector<16x32xf32>
    %cst_6 = arith.constant dense<0.000000e+00> : vector<16xf32>
    %11 = vector.multi_reduction <add>, %10, %cst_6 [1] : vector<16x32xf32> to vector<16xf32>
    %12 = vector.shape_cast %11 : vector<16xf32> to vector<16x1xf32>
    %cst_7 = arith.constant 3.200000e+01 : f32
    %13 = vector.broadcast %cst_7 : f32 to vector<16x1xf32>
    %14 = arith.divf %12, %13 : vector<16x1xf32>
    %15 = vector.broadcast %7 : vector<16x1xf32> to vector<16x32xf32>
    %16 = arith.subf %1, %15 : vector<16x32xf32>
    %cst_8 = arith.constant 9.99999974E-6 : f32
    %17 = vector.broadcast %cst_8 : f32 to vector<16x1xf32>
    %18 = arith.addf %14, %17 : vector<16x1xf32>
    %19 = math.rsqrt %18 : vector<16x1xf32>
    %20 = vector.broadcast %19 : vector<16x1xf32> to vector<16x32xf32>
    %21 = arith.mulf %16, %20 : vector<16x32xf32>
    %c0_9 = arith.constant 0 : index
    %c0_10 = arith.constant 0 : index
    %22 = vector.load %arg4[%c0_9, %c0_10] : memref<1x32xf32, #tpu.memory_space<vmem>>, vector<1x32xf32>
    %23 = vector.broadcast %22 : vector<1x32xf32> to vector<16x32xf32>
    %24 = arith.mulf %21, %23 : vector<16x32xf32>
    %c0_11 = arith.constant 0 : index
    %c0_12 = arith.constant 0 : index
    %25 = vector.load %arg5[%c0_11, %c0_12] : memref<1x32xf32, #tpu.memory_space<vmem>>, vector<1x32xf32>
    %26 = vector.broadcast %25 : vector<1x32xf32> to vector<16x32xf32>
    %27 = arith.addf %24, %26 : vector<16x32xf32>
    %cst_13 = arith.constant dense<0.000000e+00> : vector<8xf32>
    %28 = vector.multi_reduction <add>, %3, %cst_13 [1] : vector<8x16xf32> to vector<8xf32>
    %29 = vector.shape_cast %28 : vector<8xf32> to vector<8x1xf32>
    %cst_14 = arith.constant 1.600000e+01 : f32
    %30 = vector.broadcast %cst_14 : f32 to vector<8x1xf32>
    %31 = arith.divf %29, %30 : vector<8x1xf32>
    %32 = vector.broadcast %31 : vector<8x1xf32> to vector<8x16xf32>
    %33 = arith.subf %3, %32 : vector<8x16xf32>
    %34 = arith.mulf %33, %33 : vector<8x16xf32>
    %cst_15 = arith.constant dense<0.000000e+00> : vector<8xf32>
    %35 = vector.multi_reduction <add>, %34, %cst_15 [1] : vector<8x16xf32> to vector<8xf32>
    %36 = vector.shape_cast %35 : vector<8xf32> to vector<8x1xf32>
    %cst_16 = arith.constant 1.600000e+01 : f32
    %37 = vector.broadcast %cst_16 : f32 to vector<8x1xf32>
    %38 = arith.divf %36, %37 : vector<8x1xf32>
    %39 = vector.broadcast %31 : vector<8x1xf32> to vector<8x16xf32>
    %40 = arith.subf %3, %39 : vector<8x16xf32>
    %cst_17 = arith.constant 9.99999974E-6 : f32
    %41 = vector.broadcast %cst_17 : f32 to vector<8x1xf32>
    %42 = arith.addf %38, %41 : vector<8x1xf32>
    %43 = math.rsqrt %42 : vector<8x1xf32>
    %44 = vector.broadcast %43 : vector<8x1xf32> to vector<8x16xf32>
    %45 = arith.mulf %40, %44 : vector<8x16xf32>
    %c0_18 = arith.constant 0 : index
    %c0_19 = arith.constant 0 : index
    %46 = vector.load %arg6[%c0_18, %c0_19] : memref<1x16xf32, #tpu.memory_space<vmem>>, vector<1x16xf32>
    %47 = vector.broadcast %46 : vector<1x16xf32> to vector<8x16xf32>
    %48 = arith.mulf %45, %47 : vector<8x16xf32>
    %c0_20 = arith.constant 0 : index
    %c0_21 = arith.constant 0 : index
    %49 = vector.load %arg7[%c0_20, %c0_21] : memref<1x16xf32, #tpu.memory_space<vmem>>, vector<1x16xf32>
    %50 = vector.broadcast %49 : vector<1x16xf32> to vector<8x16xf32>
    %51 = arith.addf %48, %50 : vector<8x16xf32>
    %c0_22 = arith.constant 0 : index
    %c0_23 = arith.constant 0 : index
    %52 = vector.load %arg8[%c0_22, %c0_23] : memref<32x16xf32, #tpu.memory_space<vmem>>, vector<32x16xf32>
    %cst_24 = arith.constant dense<0.000000e+00> : vector<16x16xf32>
    %53 = tpu.matmul %27, %52, %cst_24 {dimension_numbers = #tpu.dot_dimension_numbers<[1], [0], [0], [1], [0, 0, 1, 1], [], []>} : vector<16x32xf32>, vector<32x16xf32>, vector<16x16xf32> -> vector<16x16xf32>
    %c0_25 = arith.constant 0 : index
    %c0_26 = arith.constant 0 : index
    %54 = vector.load %arg9[%c0_25, %c0_26] : memref<16x32xf32, #tpu.memory_space<vmem>>, vector<16x32xf32>
    %cst_27 = arith.constant dense<0.000000e+00> : vector<8x32xf32>
    %55 = tpu.matmul %51, %54, %cst_27 {dimension_numbers = #tpu.dot_dimension_numbers<[1], [0], [0], [1], [0, 0, 1, 1], [], []>} : vector<8x16xf32>, vector<16x32xf32>, vector<8x32xf32> -> vector<8x32xf32>
    %c0_28 = arith.constant 0 : index
    %c0_29 = arith.constant 0 : index
    %56 = vector.load %arg10[%c0_28, %c0_29] : memref<1x32xf32, #tpu.memory_space<vmem>>, vector<1x32xf32>
    %57 = vector.broadcast %56 : vector<1x32xf32> to vector<8x32xf32>
    %58 = arith.addf %55, %57 : vector<8x32xf32>
    %59 = vector.extract_strided_slice %53 {offsets = [0, 0], sizes = [16, 8], strides = [1, 1]} : vector<16x16xf32> to vector<16x8xf32>
    %60 = vector.extract_strided_slice %58 {offsets = [0, 0], sizes = [8, 8], strides = [1, 1]} : vector<8x32xf32> to vector<8x8xf32>
    %61 = vector.extract_strided_slice %58 {offsets = [0, 16], sizes = [8, 8], strides = [1, 1]} : vector<8x32xf32> to vector<8x8xf32>
    %cst_30 = arith.constant dense<0.000000e+00> : vector<16x8xf32>
    %62 = tpu.matmul %59, %60, %cst_30 {dimension_numbers = #tpu.dot_dimension_numbers<[1], [1], [0], [0], [0, 0, 1, 0], [], []>} : vector<16x8xf32>, vector<8x8xf32>, vector<16x8xf32> -> vector<16x8xf32>
    %cst_31 = arith.constant 0.353553385 : f32
    %63 = vector.broadcast %cst_31 : f32 to vector<16x8xf32>
    %64 = arith.mulf %62, %63 : vector<16x8xf32>
    %cst_32 = arith.constant dense<0xFF800000> : vector<16xf32>
    %65 = vector.multi_reduction <maximumf>, %64, %cst_32 [1] : vector<16x8xf32> to vector<16xf32>
    %66 = vector.shape_cast %65 : vector<16xf32> to vector<16x1xf32>
    %67 = vector.broadcast %66 : vector<16x1xf32> to vector<16x8xf32>
    %68 = arith.subf %64, %67 : vector<16x8xf32>
    %69 = math.exp %68 : vector<16x8xf32>
    %cst_33 = arith.constant dense<0.000000e+00> : vector<16xf32>
    %70 = vector.multi_reduction <add>, %69, %cst_33 [1] : vector<16x8xf32> to vector<16xf32>
    %71 = vector.shape_cast %70 : vector<16xf32> to vector<16x1xf32>
    %72 = vector.broadcast %71 : vector<16x1xf32> to vector<16x8xf32>
    %73 = arith.divf %69, %72 : vector<16x8xf32>
    %cst_34 = arith.constant dense<0.000000e+00> : vector<16x8xf32>
    %74 = tpu.matmul %73, %61, %cst_34 {dimension_numbers = #tpu.dot_dimension_numbers<[1], [0], [0], [1], [0, 0, 1, 1], [], []>} : vector<16x8xf32>, vector<8x8xf32>, vector<16x8xf32> -> vector<16x8xf32>
    %75 = vector.extract_strided_slice %53 {offsets = [0, 8], sizes = [16, 8], strides = [1, 1]} : vector<16x16xf32> to vector<16x8xf32>
    %76 = vector.extract_strided_slice %58 {offsets = [0, 8], sizes = [8, 8], strides = [1, 1]} : vector<8x32xf32> to vector<8x8xf32>
    %77 = vector.extract_strided_slice %58 {offsets = [0, 24], sizes = [8, 8], strides = [1, 1]} : vector<8x32xf32> to vector<8x8xf32>
    %cst_35 = arith.constant dense<0.000000e+00> : vector<16x8xf32>
    %78 = tpu.matmul %75, %76, %cst_35 {dimension_numbers = #tpu.dot_dimension_numbers<[1], [1], [0], [0], [0, 0, 1, 0], [], []>} : vector<16x8xf32>, vector<8x8xf32>, vector<16x8xf32> -> vector<16x8xf32>
    %cst_36 = arith.constant 0.353553385 : f32
    %79 = vector.broadcast %cst_36 : f32 to vector<16x8xf32>
    %80 = arith.mulf %78, %79 : vector<16x8xf32>
    %cst_37 = arith.constant dense<0xFF800000> : vector<16xf32>
    %81 = vector.multi_reduction <maximumf>, %80, %cst_37 [1] : vector<16x8xf32> to vector<16xf32>
    %82 = vector.shape_cast %81 : vector<16xf32> to vector<16x1xf32>
    %83 = vector.broadcast %82 : vector<16x1xf32> to vector<16x8xf32>
    %84 = arith.subf %80, %83 : vector<16x8xf32>
    %85 = math.exp %84 : vector<16x8xf32>
    %cst_38 = arith.constant dense<0.000000e+00> : vector<16xf32>
    %86 = vector.multi_reduction <add>, %85, %cst_38 [1] : vector<16x8xf32> to vector<16xf32>
    %87 = vector.shape_cast %86 : vector<16xf32> to vector<16x1xf32>
    %88 = vector.broadcast %87 : vector<16x1xf32> to vector<16x8xf32>
    %89 = arith.divf %85, %88 : vector<16x8xf32>
    %cst_39 = arith.constant dense<0.000000e+00> : vector<16x8xf32>
    %90 = tpu.matmul %89, %77, %cst_39 {dimension_numbers = #tpu.dot_dimension_numbers<[1], [0], [0], [1], [0, 0, 1, 1], [], []>} : vector<16x8xf32>, vector<8x8xf32>, vector<16x8xf32> -> vector<16x8xf32>
    %91 = tpu.concatenate %74, %90 in 1 : vector<16x8xf32>, vector<16x8xf32> -> vector<16x16xf32>
    %c0_40 = arith.constant 0 : index
    %c0_41 = arith.constant 0 : index
    %92 = vector.load %arg11[%c0_40, %c0_41] : memref<16x32xf32, #tpu.memory_space<vmem>>, vector<16x32xf32>
    %cst_42 = arith.constant dense<0.000000e+00> : vector<16x32xf32>
    %93 = tpu.matmul %91, %92, %cst_42 {dimension_numbers = #tpu.dot_dimension_numbers<[1], [0], [0], [1], [0, 0, 1, 1], [], []>} : vector<16x16xf32>, vector<16x32xf32>, vector<16x32xf32> -> vector<16x32xf32>
    %c0_43 = arith.constant 0 : index
    %c0_44 = arith.constant 0 : index
    %94 = vector.load %arg12[%c0_43, %c0_44] : memref<1x32xf32, #tpu.memory_space<vmem>>, vector<1x32xf32>
    %95 = vector.broadcast %94 : vector<1x32xf32> to vector<16x32xf32>
    %96 = arith.addf %93, %95 : vector<16x32xf32>
    %97 = arith.addf %27, %96 : vector<16x32xf32>
    %c0_45 = arith.constant 0 : index
    %c0_46 = arith.constant 0 : index
    %c0_47 = arith.constant 0 : index
    %98 = vector.load %arg13[%c0_45, %c0_46, %c0_47] : memref<1x16x32xf32, #tpu.memory_space<vmem>>, vector<1x16x32xf32>
    %99 = vector.shape_cast %98 : vector<1x16x32xf32> to vector<16x32xf32>
    %100 = vector.shape_cast %97 : vector<16x32xf32> to vector<1x16x32xf32>
    tpu.vector_store %arg13[%c0_45, %c0_46, %c0_47], %100 {strides = array<i32>} : memref<1x16x32xf32, #tpu.memory_space<vmem>>, vector<1x16x32xf32>,
    return
  }
  func.func @transform_0(%arg0: i32, %arg1: i32) -> (i32, i32, i32) {
    %c0_i32 = arith.constant 0 : i32
    %c0_i32_0 = arith.constant 0 : i32
    return %arg0, %arg1, %c0_i32 : i32, i32, i32
  }
  func.func @transform_1(%arg0: i32, %arg1: i32) -> (i32, i32, i32) {
    %c0_i32 = arith.constant 0 : i32
    %c0_i32_0 = arith.constant 0 : i32
    %c0_i32_1 = arith.constant 0 : i32
    return %arg0, %c0_i32, %c0_i32_0 : i32, i32, i32
  }
  func.func @transform_2(%arg0: i32, %arg1: i32) -> (i32, i32) {
    %c0_i32 = arith.constant 0 : i32
    %c0_i32_0 = arith.constant 0 : i32
    %c0_i32_1 = arith.constant 0 : i32
    return %c0_i32, %c0_i32_0 : i32, i32
  }
  func.func @transform_3(%arg0: i32, %arg1: i32) -> (i32, i32) {
    %c0_i32 = arith.constant 0 : i32
    %c0_i32_0 = arith.constant 0 : i32
    %c0_i32_1 = arith.constant 0 : i32
    return %c0_i32, %c0_i32_0 : i32, i32
  }
  func.func @transform_4(%arg0: i32, %arg1: i32) -> (i32, i32) {
    %c0_i32 = arith.constant 0 : i32
    %c0_i32_0 = arith.constant 0 : i32
    %c0_i32_1 = arith.constant 0 : i32
    return %c0_i32, %c0_i32_0 : i32, i32
  }
  func.func @transform_5(%arg0: i32, %arg1: i32) -> (i32, i32) {
    %c0_i32 = arith.constant 0 : i32
    %c0_i32_0 = arith.constant 0 : i32
    %c0_i32_1 = arith.constant 0 : i32
    return %c0_i32, %c0_i32_0 : i32, i32
  }
  func.func @transform_6(%arg0: i32, %arg1: i32) -> (i32, i32) {
    %c0_i32 = arith.constant 0 : i32
    %c0_i32_0 = arith.constant 0 : i32
    %c0_i32_1 = arith.constant 0 : i32
    return %c0_i32, %c0_i32_0 : i32, i32
  }
  func.func @transform_7(%arg0: i32, %arg1: i32) -> (i32, i32) {
    %c0_i32 = arith.constant 0 : i32
    %c0_i32_0 = arith.constant 0 : i32
    %c0_i32_1 = arith.constant 0 : i32
    return %c0_i32, %c0_i32_0 : i32, i32
  }
  func.func @transform_8(%arg0: i32, %arg1: i32) -> (i32, i32) {
    %c0_i32 = arith.constant 0 : i32
    %c0_i32_0 = arith.constant 0 : i32
    %c0_i32_1 = arith.constant 0 : i32
    return %c0_i32, %c0_i32_0 : i32, i32
  }
  func.func @transform_9(%arg0: i32, %arg1: i32) -> (i32, i32) {
    %c0_i32 = arith.constant 0 : i32
    %c0_i32_0 = arith.constant 0 : i32
    %c0_i32_1 = arith.constant 0 : i32
    return %c0_i32, %c0_i32_0 : i32, i32
  }
  func.func @transform_10(%arg0: i32, %arg1: i32) -> (i32, i32) {
    %c0_i32 = arith.constant 0 : i32
    %c0_i32_0 = arith.constant 0 : i32
    %c0_i32_1 = arith.constant 0 : i32
    return %c0_i32, %c0_i32_0 : i32, i32
  }
  func.func @transform_11(%arg0: i32, %arg1: i32) -> (i32, i32, i32) {
    %c0_i32 = arith.constant 0 : i32
    %c0_i32_0 = arith.constant 0 : i32
    return %arg0, %arg1, %c0_i32 : i32, i32, i32
  }
}

</mosaic_0001>

<llo_original>
// kernel: tpu_custom_call.1
$region0: #{tpu_custom_call.1}
  #allocation0 [shape = 'u32[]', space=smem, size = 0x4, offset = 0x4, fixed_abs, tag = 'smem constant byte address 0x4 - core index']
  #allocation1 [shape = 'u32[72,128]{1,0:T(1,128)}', space=vmem, size = 0x9000, scoped, tag = 'internal scratch']
  %s0 = inlined_call_operand.vmem [shape: f32[2,16,32], index: 0, kind: input, shape index: {}]
  %s1 = inlined_call_operand.vmem [shape: f32[2,8,16], index: 1, kind: input, shape index: {}]
  %s2 = inlined_call_operand.vmem [shape: f32[1,32], index: 2, kind: input, shape index: {}]
  %s3 = inlined_call_operand.vmem [shape: f32[1,32], index: 3, kind: input, shape index: {}]
  %s4 = inlined_call_operand.vmem [shape: f32[1,16], index: 4, kind: input, shape index: {}]
  %s5 = inlined_call_operand.vmem [shape: f32[1,16], index: 5, kind: input, shape index: {}]
  %s6 = inlined_call_operand.vmem [shape: f32[32,16], index: 6, kind: input, shape index: {}]
  %s7 = inlined_call_operand.hbm [shape: f32[16,32], index: 7, kind: input, shape index: {}]
  %s8 = inlined_call_operand.vmem [shape: f32[1,32], index: 8, kind: input, shape index: {}]
  %s9 = inlined_call_operand.hbm [shape: f32[16,32], index: 9, kind: input, shape index: {}]
  %s10 = inlined_call_operand.vmem [shape: f32[1,32], index: 10, kind: input, shape index: {}]
  %s11 = inlined_call_operand.hbm [shape: f32[2,16,32], index: 11, kind: output, shape index: {}]
  %s12 = sld [smem:[#allocation0]]
  $region85: #{tpu_custom_call.1} parent=0
    _
  %s14 = ssub.s32 1, %s12
  %s15 = scalar_select 0, %s14, %s12
  $region1: #{tpu_custom_call.1} parent=0
    #allocation2 [shape = 'u8[8192]{0}', space=vmem, size = 0x2000, scoped, tag = 'input window, operand 7, single buffered']
    #allocation3 [shape = 's32[2]{0}', space=sflag, size = 0x8, scoped, tag = 'scoped memory for tpu_custom_call.1']
    #allocation4 [shape = 's32[2]{0}', space=sflag, size = 0x8, scoped, tag = 'scoped memory for tpu_custom_call.1']
    #allocation5 [shape = 'u8[8192]{0}', space=vmem, size = 0x2000, scoped, tag = 'input window, operand 9, single buffered']
    #allocation6 [shape = 's32[1]{0}', space=sflag, size = 0x4, scoped, tag = 'scoped memory for tpu_custom_call.1']
    #allocation7 [shape = 'u8[16384]{0}', space=vmem, size = 0x4000, scoped, tag = 'output window, operand 0']
    %16 = vsyncpa [#allocation3], 0
    %17 = vsyncpa [#allocation6], 0
    %18 = vsyncpa [#allocation4], 0
    %s19 = scalar_lea.sflag [#allocation4], 1
    %20 = vsyncpa %s19, 0
    loop: start=0, step=1, limit=4
    $region2: #{tpu_custom_call.1} parent=1 // loop_pre_header
      _
    $region3: #{tpu_custom_call.1} parent=1 // loop_header
      %s22 = sphi 0, %s26
      %p23 = scmp.ge.s32.totalorder %s22, 4
      %s29 = sphi 0, %s41
      %s30 = sphi 0, %s37
      %s31 = sphi 0, %s29
      %s32 = sphi 0, %s30
      %s33 = sphi 0, %s31
      %s34 = sphi 0, %s32
      %s46 = sphi 0, %s48
      %s49 = sphi 0, %s46
      %s50 = sphi 0, %s49
      %s66 = sphi 0, %s50
      %s72 = sphi 0, %s74
      %s75 = sphi 0, %s72
      %s76 = sphi 0, %s75
      %s92 = sphi 0, %s76
      %s96 = sphi 0, %s96
      %s98 = sphi 0, %s96
      %s99 = sphi 0, %s98
      %s113 = sphi 0, %s99
      %s117 = sphi 0, %s117
      %s119 = sphi 0, %s117
      %s120 = sphi 0, %s119
      %s134 = sphi 0, %s120
      %s138 = sphi 0, %s138
      %s140 = sphi 0, %s138
      %s141 = sphi 0, %s140
      %s155 = sphi 0, %s141
      %s159 = sphi 0, %s159
      %s161 = sphi 0, %s159
      %s162 = sphi 0, %s161
      %s176 = sphi 0, %s162
      %s180 = sphi 0, %s180
      %s182 = sphi 0, %s180
      %s183 = sphi 0, %s182
      %s197 = sphi 0, %s183
      %s201 = sphi 0, %s201
      %s203 = sphi 0, %s201
      %s204 = sphi 0, %s203
      %s218 = sphi 0, %s204
      %s222 = sphi 0, %s222
      %s224 = sphi 0, %s222
      %s225 = sphi 0, %s224
      %s239 = sphi 0, %s225
      %s243 = sphi 0, %s243
      %s245 = sphi 0, %s243
      %s246 = sphi 0, %s245
      %s260 = sphi 0, %s246
      %s264 = sphi 0, %s264
      %s266 = sphi 0, %s264
      %s267 = sphi 0, %s266
      %s281 = sphi 0, %s267
      %s289 = sphi 0, %s291
      %s292 = sphi 0, %s289
      %s293 = sphi 0, %s292
      %s309 = sphi 0, %s293
    $region4: #{tpu_custom_call.1} parent=1 // loop_header_branch
      %25 = sbr.rel (%p23) target = $region8
    $region5: #{tpu_custom_call.1} parent=1 // loop_body
      %s27 = ssub.s32 %s22, 1
      %s28 = ssub.s32 %s22, 2
      %s35 = sadd.s32 1, %s30
      %p36 = scmp.ge.s32.totalorder %s35, 1
      %s37 = scalar_select %p36, 0, %s35
      %s38 = sadd.s32 1, %s29
      %s39 = scalar_select %p36, %s38, %s29
      %p40 = scmp.ge.s32.totalorder %s39, 2
      %s41 = scalar_select %p40, 0, %s39
      %s42 = ssub.s32 %s29, %s41
      %s43 = ssub.s32 %s30, %s37
      %s44 = sor.u32 %s42, %s43
      %p45 = scmp.eq.s32.totalorder %s44, 0
      %s47 = sadd.s32 %s46, 1
      %s48 = scalar_select %p45, %s46, %s47
      %p51 = pneg %p45
      %p52 = scmp.eq.s32.totalorder %s22, 1
      %p53 = por %p51, %p52
      %p54 = scmp.ne.s32.totalorder %s46, %s49
      %p55 = scmp.eq.s32.totalorder %s22, 0
      %p56 = por %p54, %p55
      %p57 = scmp.ne.s32.totalorder %s46, %s49
      %p58 = scmp.eq.s32.totalorder %s27, 1
      %p59 = por %p57, %p58
      %p60 = scmp.ne.s32.totalorder %s49, %s50
      %p61 = scmp.eq.s32.totalorder %s27, 0
      %p62 = por %p60, %p61
      %p63 = scmp.ne.s32.totalorder %s49, %s50
      %p64 = scmp.eq.s32.totalorder %s28, 1
      %p65 = por %p63, %p64
      %p67 = scmp.ne.s32.totalorder %s50, %s66
      %p68 = scmp.eq.s32.totalorder %s28, 0
      %p69 = por %p67, %p68
      %s70 = ssub.s32 %s29, %s41
      %p71 = scmp.eq.s32.totalorder %s70, 0
      %s73 = sadd.s32 %s72, 1
      %s74 = scalar_select %p71, %s72, %s73
      %p77 = pneg %p71
      %p78 = scmp.eq.s32.totalorder %s22, 1
      %p79 = por %p77, %p78
      %p80 = scmp.ne.s32.totalorder %s72, %s75
      %p81 = scmp.eq.s32.totalorder %s22, 0
      %p82 = por %p80, %p81
      %p83 = scmp.ne.s32.totalorder %s72, %s75
      %p84 = scmp.eq.s32.totalorder %s27, 1
      %p85 = por %p83, %p84
      %p86 = scmp.ne.s32.totalorder %s75, %s76
      %p87 = scmp.eq.s32.totalorder %s27, 0
      %p88 = por %p86, %p87
      %p89 = scmp.ne.s32.totalorder %s75, %s76
      %p90 = scmp.eq.s32.totalorder %s28, 1
      %p91 = por %p89, %p90
      %p93 = scmp.ne.s32.totalorder %s76, %s92
      %p94 = scmp.eq.s32.totalorder %s28, 0
      %p95 = por %p93, %p94
      %s97 = sadd.s32 %s96, 1
      %p100 = scmp.eq.s32.totalorder %s22, 1
      %p101 = scmp.ne.s32.totalorder %s96, %s98
      %p102 = scmp.eq.s32.totalorder %s22, 0
      %p103 = por %p101, %p102
      %p104 = scmp.ne.s32.totalorder %s96, %s98
      %p105 = scmp.eq.s32.totalorder %s27, 1
      %p106 = por %p104, %p105
      %p107 = scmp.ne.s32.totalorder %s98, %s99
      %p108 = scmp.eq.s32.totalorder %s27, 0
      %p109 = por %p107, %p108
      %p110 = scmp.ne.s32.totalorder %s98, %s99
      %p111 = scmp.eq.s32.totalorder %s28, 1
      %p112 = por %p110, %p111
      %p114 = scmp.ne.s32.totalorder %s99, %s113
      %p115 = scmp.eq.s32.totalorder %s28, 0
      %p116 = por %p114, %p115
      %s118 = sadd.s32 %s117, 1
      %p121 = scmp.eq.s32.totalorder %s22, 1
      %p122 = scmp.ne.s32.totalorder %s117, %s119
      %p123 = scmp.eq.s32.totalorder %s22, 0
      %p124 = por %p122, %p123
      %p125 = scmp.ne.s32.totalorder %s117, %s119
      %p126 = scmp.eq.s32.totalorder %s27, 1
      %p127 = por %p125, %p126
      %p128 = scmp.ne.s32.totalorder %s119, %s120
      %p129 = scmp.eq.s32.totalorder %s27, 0
      %p130 = por %p128, %p129
      %p131 = scmp.ne.s32.totalorder %s119, %s120
      %p132 = scmp.eq.s32.totalorder %s28, 1
      %p133 = por %p131, %p132
      %p135 = scmp.ne.s32.totalorder %s120, %s134
      %p136 = scmp.eq.s32.totalorder %s28, 0
      %p137 = por %p135, %p136
      %s139 = sadd.s32 %s138, 1
      %p142 = scmp.eq.s32.totalorder %s22, 1
      %p143 = scmp.ne.s32.totalorder %s138, %s140
      %p144 = scmp.eq.s32.totalorder %s22, 0
      %p145 = por %p143, %p144
      %p146 = scmp.ne.s32.totalorder %s138, %s140
      %p147 = scmp.eq.s32.totalorder %s27, 1
      %p148 = por %p146, %p147
      %p149 = scmp.ne.s32.totalorder %s140, %s141
      %p150 = scmp.eq.s32.totalorder %s27, 0
      %p151 = por %p149, %p150
      %p152 = scmp.ne.s32.totalorder %s140, %s141
      %p153 = scmp.eq.s32.totalorder %s28, 1
      %p154 = por %p152, %p153
      %p156 = scmp.ne.s32.totalorder %s141, %s155
      %p157 = scmp.eq.s32.totalorder %s28, 0
      %p158 = por %p156, %p157
      %s160 = sadd.s32 %s159, 1
      %p163 = scmp.eq.s32.totalorder %s22, 1
      %p164 = scmp.ne.s32.totalorder %s159, %s161
      %p165 = scmp.eq.s32.totalorder %s22, 0
      %p166 = por %p164, %p165
      %p167 = scmp.ne.s32.totalorder %s159, %s161
      %p168 = scmp.eq.s32.totalorder %s27, 1
      %p169 = por %p167, %p168
      %p170 = scmp.ne.s32.totalorder %s161, %s162
      %p171 = scmp.eq.s32.totalorder %s27, 0
      %p172 = por %p170, %p171
      %p173 = scmp.ne.s32.totalorder %s161, %s162
      %p174 = scmp.eq.s32.totalorder %s28, 1
      %p175 = por %p173, %p174
      %p177 = scmp.ne.s32.totalorder %s162, %s176
      %p178 = scmp.eq.s32.totalorder %s28, 0
      %p179 = por %p177, %p178
      %s181 = sadd.s32 %s180, 1
      %p184 = scmp.eq.s32.totalorder %s22, 1
      %p185 = scmp.ne.s32.totalorder %s180, %s182
      %p186 = scmp.eq.s32.totalorder %s22, 0
      %p187 = por %p185, %p186
      %p188 = scmp.ne.s32.totalorder %s180, %s182
      %p189 = scmp.eq.s32.totalorder %s27, 1
      %p190 = por %p188, %p189
      %p191 = scmp.ne.s32.totalorder %s182, %s183
      %p192 = scmp.eq.s32.totalorder %s27, 0
      %p193 = por %p191, %p192
      %p194 = scmp.ne.s32.totalorder %s182, %s183
      %p195 = scmp.eq.s32.totalorder %s28, 1
      %p196 = por %p194, %p195
      %p198 = scmp.ne.s32.totalorder %s183, %s197
      %p199 = scmp.eq.s32.totalorder %s28, 0
      %p200 = por %p198, %p199
      %s202 = sadd.s32 %s201, 1
      %p205 = scmp.eq.s32.totalorder %s22, 1
      %p206 = scmp.ne.s32.totalorder %s201, %s203
      %p207 = scmp.eq.s32.totalorder %s22, 0
      %p208 = por %p206, %p207
      %p209 = scmp.ne.s32.totalorder %s201, %s203
      %p210 = scmp.eq.s32.totalorder %s27, 1
      %p211 = por %p209, %p210
      %p212 = scmp.ne.s32.totalorder %s203, %s204
      %p213 = scmp.eq.s32.totalorder %s27, 0
      %p214 = por %p212, %p213
      %p215 = scmp.ne.s32.totalorder %s203, %s204
      %p216 = scmp.eq.s32.totalorder %s28, 1
      %p217 = por %p215, %p216
      %p219 = scmp.ne.s32.totalorder %s204, %s218
      %p220 = scmp.eq.s32.totalorder %s28, 0
      %p221 = por %p219, %p220
      %s223 = sadd.s32 %s222, 1
      %p226 = scmp.eq.s32.totalorder %s22, 1
      %p227 = scmp.ne.s32.totalorder %s222, %s224
      %p228 = scmp.eq.s32.totalorder %s22, 0
      %p229 = por %p227, %p228
      %p230 = scmp.ne.s32.totalorder %s222, %s224
      %p231 = scmp.eq.s32.totalorder %s27, 1
      %p232 = por %p230, %p231
      %p233 = scmp.ne.s32.totalorder %s224, %s225
      %p234 = scmp.eq.s32.totalorder %s27, 0
      %p235 = por %p233, %p234
      %p236 = scmp.ne.s32.totalorder %s224, %s225
      %p237 = scmp.eq.s32.totalorder %s28, 1
      %p238 = por %p236, %p237
      %p240 = scmp.ne.s32.totalorder %s225, %s239
      %p241 = scmp.eq.s32.totalorder %s28, 0
      %p242 = por %p240, %p241
      %s244 = sadd.s32 %s243, 1
      %p247 = scmp.eq.s32.totalorder %s22, 1
      %p248 = scmp.ne.s32.totalorder %s243, %s245
      %p249 = scmp.eq.s32.totalorder %s22, 0
      %p250 = por %p248, %p249
      %p251 = scmp.ne.s32.totalorder %s243, %s245
      %p252 = scmp.eq.s32.totalorder %s27, 1
      %p253 = por %p251, %p252
      %p254 = scmp.ne.s32.totalorder %s245, %s246
      %p255 = scmp.eq.s32.totalorder %s27, 0
      %p256 = por %p254, %p255
      %p257 = scmp.ne.s32.totalorder %s245, %s246
      %p258 = scmp.eq.s32.totalorder %s28, 1
      %p259 = por %p257, %p258
      %p261 = scmp.ne.s32.totalorder %s246, %s260
      %p262 = scmp.eq.s32.totalorder %s28, 0
      %p263 = por %p261, %p262
      %s265 = sadd.s32 %s264, 1
      %p268 = scmp.eq.s32.totalorder %s22, 1
      %p269 = scmp.ne.s32.totalorder %s264, %s266
      %p270 = scmp.eq.s32.totalorder %s22, 0
      %p271 = por %p269, %p270
      %p272 = scmp.ne.s32.totalorder %s264, %s266
      %p273 = scmp.eq.s32.totalorder %s27, 1
      %p274 = por %p272, %p273
      %p275 = scmp.ne.s32.totalorder %s266, %s267
      %p276 = scmp.eq.s32.totalorder %s27, 0
      %p277 = por %p275, %p276
      %p278 = scmp.ne.s32.totalorder %s266, %s267
      %p279 = scmp.eq.s32.totalorder %s28, 1
      %p280 = por %p278, %p279
      %p282 = scmp.ne.s32.totalorder %s267, %s281
      %p283 = scmp.eq.s32.totalorder %s28, 0
      %p284 = por %p282, %p283
      %s285 = ssub.s32 %s29, %s41
      %s286 = ssub.s32 %s30, %s37
      %s287 = sor.u32 %s285, %s286
      %p288 = scmp.eq.s32.totalorder %s287, 0
      %s290 = sadd.s32 %s289, 1
      %s291 = scalar_select %p288, %s289, %s290
      %p294 = pneg %p288
      %p295 = scmp.eq.s32.totalorder %s22, 1
      %p296 = por %p294, %p295
      %p297 = scmp.ne.s32.totalorder %s289, %s292
      %p298 = scmp.eq.s32.totalorder %s22, 0
      %p299 = por %p297, %p298
      %p300 = scmp.ne.s32.totalorder %s289, %s292
      %p301 = scmp.eq.s32.totalorder %s27, 1
      %p302 = por %p300, %p301
      %p303 = scmp.ne.s32.totalorder %s292, %s293
      %p304 = scmp.eq.s32.totalorder %s27, 0
      %p305 = por %p303, %p304
      %p306 = scmp.ne.s32.totalorder %s292, %s293
      %p307 = scmp.eq.s32.totalorder %s28, 1
      %p308 = por %p306, %p307
      %p310 = scmp.ne.s32.totalorder %s293, %s309
      %p311 = scmp.eq.s32.totalorder %s28, 0
      %p312 = por %p310, %p311
      %p313 = scmp.le.s32.totalorder 1, %s22
      %p314 = scmp.lt.s32.totalorder %s22, 3
      %p315 = pnand %p313, %p314
      %p316 = pneg %p315
      // Predicated region
      $region9: #{tpu_custom_call.1} parent=5 // pred_check
        _
      $region10: #{tpu_custom_call.1} parent=5 // pred_check_branch
        %318 = sbr.rel (%p315) target = $region12
      $region11: #{tpu_custom_call.1} parent=5 // pred_region
        %s319 = ssub.s32 %s22, 1
        // Predicated region
        $region13: #{tpu_custom_call.1} parent=11 // pred_check
          %p320 = pneg %p109
        $region14: #{tpu_custom_call.1} parent=11 // pred_check_branch
          %322 = sbr.rel (%p320) target = $region16
        $region15: #{tpu_custom_call.1} parent=11 // pred_region
          _
        $region16: #{tpu_custom_call.1} parent=11 // pred_fallthru
          _
        // Predicated region
        $region17: #{tpu_custom_call.1} parent=11 // pred_check
          %p323 = pneg %p130
        $region18: #{tpu_custom_call.1} parent=11 // pred_check_branch
          %325 = sbr.rel (%p323) target = $region20
        $region19: #{tpu_custom_call.1} parent=11 // pred_region
          _
        $region20: #{tpu_custom_call.1} parent=11 // pred_fallthru
          _
        // Predicated region
        $region21: #{tpu_custom_call.1} parent=11 // pred_check
          %p326 = pneg %p151
        $region22: #{tpu_custom_call.1} parent=11 // pred_check_branch
          %328 = sbr.rel (%p326) target = $region24
        $region23: #{tpu_custom_call.1} parent=11 // pred_region
          _
        $region24: #{tpu_custom_call.1} parent=11 // pred_fallthru
          _
        // Predicated region
        $region25: #{tpu_custom_call.1} parent=11 // pred_check
          %p329 = pneg %p172
        $region26: #{tpu_custom_call.1} parent=11 // pred_check_branch
          %331 = sbr.rel (%p329) target = $region28
        $region27: #{tpu_custom_call.1} parent=11 // pred_region
          _
        $region28: #{tpu_custom_call.1} parent=11 // pred_fallthru
          _
        // Predicated region
        $region29: #{tpu_custom_call.1} parent=11 // pred_check
          %p332 = pneg %p193
        $region30: #{tpu_custom_call.1} parent=11 // pred_check_branch
          %334 = sbr.rel (%p332) target = $region32
        $region31: #{tpu_custom_call.1} parent=11 // pred_region
          _
        $region32: #{tpu_custom_call.1} parent=11 // pred_fallthru
          _
        // Predicated region
        $region33: #{tpu_custom_call.1} parent=11 // pred_check
          %p335 = pneg %p214
        $region34: #{tpu_custom_call.1} parent=11 // pred_check_branch
          %337 = sbr.rel (%p335) target = $region36
        $region35: #{tpu_custom_call.1} parent=11 // pred_region
          %339 = vsyncadd [#allocation3], 0
          %s340 = sshll.u32 %s7, 4
          %s341 = int_to_ptr.hbm [resolvable:$true] %s340
          %s342 = sshll.u32 [#allocation2], 4
          %s343 = int_to_ptr.vmem [resolvable:$true] %s342
          %348 = dma.hbm_to_vmem [thread:$0]  %s341, 256, %s343, [#allocation3], 128, 128, 8
        $region36: #{tpu_custom_call.1} parent=11 // pred_fallthru
          _
        // Predicated region
        $region37: #{tpu_custom_call.1} parent=11 // pred_check
          %p349 = pneg %p235
        $region38: #{tpu_custom_call.1} parent=11 // pred_check_branch
          %351 = sbr.rel (%p349) target = $region40
        $region39: #{tpu_custom_call.1} parent=11 // pred_region
          _
        $region40: #{tpu_custom_call.1} parent=11 // pred_fallthru
          _
        // Predicated region
        $region41: #{tpu_custom_call.1} parent=11 // pred_check
          %p352 = pneg %p256
        $region42: #{tpu_custom_call.1} parent=11 // pred_check_branch
          %354 = sbr.rel (%p352) target = $region44
        $region43: #{tpu_custom_call.1} parent=11 // pred_region
          %356 = vsyncadd [#allocation6], 0
          %s357 = sshll.u32 %s9, 4
          %s358 = int_to_ptr.hbm [resolvable:$true] %s357
          %s359 = sshll.u32 [#allocation5], 4
          %s360 = int_to_ptr.vmem [resolvable:$true] %s359
          %365 = dma.hbm_to_vmem [thread:$0]  %s358, 256, %s360, [#allocation6], 128, 128, 8
        $region44: #{tpu_custom_call.1} parent=11 // pred_fallthru
          _
        // Predicated region
        $region45: #{tpu_custom_call.1} parent=11 // pred_check
          %p366 = pneg %p277
        $region46: #{tpu_custom_call.1} parent=11 // pred_check_branch
          %368 = sbr.rel (%p366) target = $region48
        $region47: #{tpu_custom_call.1} parent=11 // pred_region
          _
        $region48: #{tpu_custom_call.1} parent=11 // pred_fallthru
          _
      $region12: #{tpu_custom_call.1} parent=5 // pred_fallthru
        _
      %p369 = scmp.lt.s32.totalorder %s22, 2
      // Predicated region
      $region49: #{tpu_custom_call.1} parent=5 // pred_check
        %p370 = pneg %p369
      $region50: #{tpu_custom_call.1} parent=5 // pred_check_branch
        %372 = sbr.rel (%p370) target = $region52
      $region51: #{tpu_custom_call.1} parent=5 // pred_region
        // Predicated region
        $region53: #{tpu_custom_call.1} parent=51 // pred_check
          %p373 = pneg %p56
        $region54: #{tpu_custom_call.1} parent=51 // pred_check_branch
          %375 = sbr.rel (%p373) target = $region56
        $region55: #{tpu_custom_call.1} parent=51 // pred_region
          %s376 = smul.u32 2, %s30
          %p377 = scmp.lt.s32.totalorder %s29, 1
          %s378 = scalar_select %p377, %s29, 1
          %p379 = scmp.lt.s32.totalorder %s376, 1
          %s380 = scalar_select %p379, %s376, 1
          %s381 = smul.addr %s378, 2
          %s382 = sadd.s32 %s380, %s381
          %s383 = smul.addr %s382, 8
          %s384 = scalar_lea.vmem %s0, %s383
          %s385 = smul.u32 2, %s30
        $region56: #{tpu_custom_call.1} parent=51 // pred_fallthru
          _
        // Predicated region
        $region57: #{tpu_custom_call.1} parent=51 // pred_check
          %p386 = pneg %p82
        $region58: #{tpu_custom_call.1} parent=51 // pred_check_branch
          %388 = sbr.rel (%p386) target = $region60
        $region59: #{tpu_custom_call.1} parent=51 // pred_region
          %p389 = scmp.lt.s32.totalorder %s29, 1
          %s390 = scalar_select %p389, %s29, 1
          %s391 = smul.addr %s390, 8
          %s392 = scalar_lea.vmem %s1, %s391
        $region60: #{tpu_custom_call.1} parent=51 // pred_fallthru
          _
      $region52: #{tpu_custom_call.1} parent=5 // pred_fallthru
        _
      %p393 = scmp.le.s32.totalorder 1, %s22
      %p394 = scmp.lt.s32.totalorder %s22, 3
      %p395 = pnand %p393, %p394
      %p396 = pneg %p395
      // Predicated region
      $region61: #{tpu_custom_call.1} parent=5 // pred_check
        _
      $region62: #{tpu_custom_call.1} parent=5 // pred_check_branch
        %398 = sbr.rel (%p395) target = $region64
      $region63: #{tpu_custom_call.1} parent=5 // pred_region
        %s399 = ssub.s32 %s22, 1
        // Predicated region
        $region65: #{tpu_custom_call.1} parent=63 // pred_check
          %p400 = pneg %p214
        $region66: #{tpu_custom_call.1} parent=63 // pred_check_branch
          %402 = sbr.rel (%p400) target = $region68
        $region67: #{tpu_custom_call.1} parent=63 // pred_region
          %404 = dma.done [#allocation3], 256
        $region68: #{tpu_custom_call.1} parent=63 // pred_fallthru
          _
        // Predicated region
        $region69: #{tpu_custom_call.1} parent=63 // pred_check
          %p405 = pneg %p256
        $region70: #{tpu_custom_call.1} parent=63 // pred_check_branch
          %407 = sbr.rel (%p405) target = $region72
        $region71: #{tpu_custom_call.1} parent=63 // pred_region
          %409 = dma.done [#allocation6], 256
        $region72: #{tpu_custom_call.1} parent=63 // pred_fallthru
          _
        %s410 = smul.u32 2, %s32
        %p411 = scmp.lt.s32.totalorder %s31, 1
        %s412 = scalar_select %p411, %s31, 1
        %p413 = scmp.lt.s32.totalorder %s410, 1
        %s414 = scalar_select %p413, %s410, 1
        %s415 = smul.addr %s412, 2
        %s416 = sadd.s32 %s414, %s415
        %s417 = smul.addr %s416, 8
        %s418 = scalar_lea.vmem %s0, %s417
        %p419 = pneg %p62
        %p420 = pneg %p59
        %p421 = scmp.lt.s32.totalorder %s31, 1
        %s422 = scalar_select %p421, %s31, 1
        %s423 = smul.addr %s422, 8
        %s424 = scalar_lea.vmem %s1, %s423
        %p425 = pneg %p88
        %p426 = pneg %p85
        %p427 = pneg %p109
        %p428 = pneg %p106
        %p429 = pneg %p130
        %p430 = pneg %p127
        %p431 = pneg %p151
        %p432 = pneg %p148
        %p433 = pneg %p172
        %p434 = pneg %p169
        %p435 = pneg %p193
        %p436 = pneg %p190
        %p437 = pneg %p214
        %p438 = pneg %p211
        %p439 = pneg %p235
        %p440 = pneg %p232
        %p441 = pneg %p256
        %p442 = pneg %p253
        %p443 = pneg %p277
        %p444 = pneg %p274
        %p445 = pneg %p305
        %p446 = pneg %p302
        %s447 = sand.u32 %s292, 1
        %s448 = scalar_lea.sflag [#allocation4], %s447
        %s449 = sand.u32 %s292, 1
        %s450 = smul.addr %s449, 16
        %s451 = scalar_lea.vmem [#allocation7], %s450
        %s452 = smul.u32 2, %s32
        %p453 = scmp.lt.s32.totalorder %s31, 1
        %s454 = scalar_select %p453, %s31, 1
        %p455 = scmp.lt.s32.totalorder %s452, 1
        %s456 = scalar_select %p455, %s452, 1
        %s457 = smul.addr %s454, 2
        %s458 = sadd.s32 %s456, %s457
        %s459 = smul.addr %s458, 8
        %s460 = scalar_lea.vmem %s0, %s459
        %s461 = smul.u32 2, %s32
        %p462 = scmp.lt.s32.totalorder %s31, 1
        %s463 = scalar_select %p462, %s31, 1
        %s464 = smul.addr %s463, 8
        %s465 = scalar_lea.vmem %s1, %s464
        %s466 = smul.u32 2, %s32
        %v467 = vld [vmem:[%s460] sm:$0xff]
        %v468 = vld [vmem:[%s460 + $0x8] sm:$0xff]
        %v469 = vld [vmem:[%s465] sm:$0xff]
        %vm470 = vcmask 261120
        %v471 = vsel %vm470, %v467, 0.0
        %472 = vadd.xlane.f32.xlu0 %v471
        %v473 = vpop.xlane.xlu0 %472
        %v474 = vsel %vm470, %v468, 0.0
        %475 = vadd.xlane.f32.xlu0 %v474
        %v476 = vpop.xlane.xlu0 %475
        %v477 = vrcp.pop 32.0
        %v478 = vmul.f32 32.0, %v477
        %v479 = vsub.f32 1.0, %v478
        %v480 = vmul.f32 %v477, %v479
        %v481 = vadd.f32 %v477, %v480
        %vm482 = vweird.f32 %v477
        %v483 = vsel %vm482, %v477, %v481
        %v484 = vmul.f32 %v473, %v483
        %v485 = vmul.f32 %v476, %v483
        %v486 = vsub.f32 %v467, %v484
        %v487 = vsub.f32 %v468, %v485
        %v488 = vmul.f32 %v486, %v486
        %v489 = vmul.f32 %v487, %v487
        %v490 = vsel %vm470, %v488, 0.0
        %491 = vadd.xlane.f32.xlu0 %v490
        %v492 = vpop.xlane.xlu0 %491
        %v493 = vsel %vm470, %v489, 0.0
        %494 = vadd.xlane.f32.xlu0 %v493
        %v495 = vpop.xlane.xlu0 %494
        %v496 = vmul.f32 %v492, %v483
        %v497 = vmul.f32 %v495, %v483
        %v498 = vadd.f32 %v496, 1e-05
        %v499 = vadd.f32 %v497, 1e-05
        %v500 = vrsqrt.pop %v498
        %v501 = vmul.f32 %v500, %v498
        %v502 = vmul.f32 %v501, %v500
        %v503 = vmul.f32 0.5, %v502
        %v504 = vsub.f32 1.5, %v503
        %v505 = vmul.f32 %v500, %v504
        %vm506 = vweird.f32 %v498
        %vm507 = vweird.f32 %v500
        %vm508 = vmor %vm506, %vm507
        %v509 = vsel %vm508, %v500, %v505
        %v510 = vrsqrt.pop %v499
        %v511 = vmul.f32 %v510, %v499
        %v512 = vmul.f32 %v511, %v510
        %v513 = vmul.f32 0.5, %v512
        %v514 = vsub.f32 1.5, %v513
        %v515 = vmul.f32 %v510, %v514
        %vm516 = vweird.f32 %v499
        %vm517 = vweird.f32 %v510
        %vm518 = vmor %vm516, %vm517
        %v519 = vsel %vm518, %v510, %v515
        %v520 = vmul.f32 %v486, %v509
        %v521 = vmul.f32 %v487, %v519
        %v522 = vld [vmem:[%s2] sm:$0x1]
        %v524 = vperm.slane %v522, 0
        %v526 = vmul.f32 %v520, %v524
        %v527 = vmul.f32 %v521, %v524
        %v528 = vld [vmem:[%s3] sm:$0x1]
        %v530 = vperm.slane %v528, 0
        %v532 = vadd.f32 %v526, %v530
        %v533 = vadd.f32 %v527, %v530
        %vm534 = vcmask 130048
        %v535 = vsel %vm534, %v469, 0.0
        %536 = vadd.xlane.f32.xlu0 %v535
        %v537 = vpop.xlane.xlu0 %536
        %v538 = vrcp.pop 16.0
        %v539 = vmul.f32 16.0, %v538
        %v540 = vsub.f32 1.0, %v539
        %v541 = vmul.f32 %v538, %v540
        %v542 = vadd.f32 %v538, %v541
        %vm543 = vweird.f32 %v538
        %v544 = vsel %vm543, %v538, %v542
        %v545 = vmul.f32 %v537, %v544
        %v546 = vsub.f32 %v469, %v545
        %v547 = vmul.f32 %v546, %v546
        %v548 = vsel %vm534, %v547, 0.0
        %549 = vadd.xlane.f32.xlu0 %v548
        %v550 = vpop.xlane.xlu0 %549
        %v551 = vmul.f32 %v550, %v544
        %v552 = vadd.f32 %v551, 1e-05
        %v553 = vrsqrt.pop %v552
        %v554 = vmul.f32 %v553, %v552
        %v555 = vmul.f32 %v554, %v553
        %v556 = vmul.f32 0.5, %v555
        %v557 = vsub.f32 1.5, %v556
        %v558 = vmul.f32 %v553, %v557
        %vm559 = vweird.f32 %v552
        %vm560 = vweird.f32 %v553
        %vm561 = vmor %vm559, %vm560
        %v562 = vsel %vm561, %v553, %v558
        %v563 = vmul.f32 %v546, %v562
        %v564 = vld [vmem:[%s4] sm:$0x1]
        %v566 = vperm.slane %v564, 0
        %v568 = vmul.f32 %v563, %v566
        %v569 = vld [vmem:[%s5] sm:$0x1]
        %v571 = vperm.slane %v569, 0
        %v573 = vadd.f32 %v568, %v571
        %v574 = vld [vmem:[%s6] sm:$0xff]
        %v575 = vld [vmem:[%s6 + $0x8] sm:$0xff]
        %v576 = vld [vmem:[%s6 + $0x10] sm:$0xff]
        %v577 = vld [vmem:[%s6 + $0x18] sm:$0xff]
        %v579 = vsel %vm470, %v532, 0
        %v582 = vsel %vm470, %v533, 0
        %584 = vmatpush.msra.mxu0 0.0
        %585 = vmatpush.msra.mxu0 0.0
        %586 = vmatpush.msra.mxu0 0.0
        %587 = vmatpush.msra.mxu0 0.0
        %588 = vmatpush.msra.mxu0 0.0
        %589 = vmatpush.msra.mxu0 0.0
        %590 = vmatpush.msra.mxu0 0.0
        %591 = vmatpush.msra.mxu0 0.0
        %592 = vmatpush.msra.mxu0 0.0
        %593 = vmatpush.msra.mxu0 0.0
        %594 = vmatpush.msra.mxu0 0.0
        %595 = vmatpush.msra.mxu0 0.0
        %596 = vmatpush.msra.mxu0 %v577
        %597 = vmatpush.msra.mxu0 %v576
        %598 = vmatpush.msra.mxu0 %v575
        %599 = vmatpush.msra.mxu0 %v574
        %600 = vmatmul.f32.gmra.mxu0 %v579
        %v601 = vpop.f32.mrf.mxu0
        %v602 = vadd.f32 0.0, %v601
        %603 = vmatmul.f32.gmra.mxu0 %v582
        %v604 = vpop.f32.mrf.mxu0
        %v605 = vadd.f32 0.0, %v604
        %606 = vdwg.mxu0
        %v607 = vld [vmem:[#allocation2] sm:$0xff]
        %v608 = vld [vmem:[#allocation2 + $0x8] sm:$0xff]
        %v609 = vld [vmem:[%s8] sm:$0x1]
        %v611 = vperm.slane %v609, 0
        %v614 = vsel %vm534, %v573, 0
        %616 = vmatpush.msra.mxu0 0.0
        %617 = vmatpush.msra.mxu0 0.0
        %618 = vmatpush.msra.mxu0 0.0
        %619 = vmatpush.msra.mxu0 0.0
        %620 = vmatpush.msra.mxu0 0.0
        %621 = vmatpush.msra.mxu0 0.0
        %622 = vmatpush.msra.mxu0 0.0
        %623 = vmatpush.msra.mxu0 0.0
        %624 = vmatpush.msra.mxu0 0.0
        %625 = vmatpush.msra.mxu0 0.0
        %626 = vmatpush.msra.mxu0 0.0
        %627 = vmatpush.msra.mxu0 0.0
        %628 = vmatpush.msra.mxu0 0.0
        %629 = vmatpush.msra.mxu0 0.0
        %630 = vmatpush.msra.mxu0 %v608
        %631 = vmatpush.msra.mxu0 %v607
        %632 = vmatmul.f32.gmra.mxu0 %v614
        %v633 = vpop.f32.mrf.mxu0
        %v634 = vadd.f32 %v611, %v633
        %635 = vdwg.mxu0
        %vm636 = vcmask 64512
        %v638 = vsel %vm636, %v602, 0
        %v641 = vsel %vm636, %v605, 0
        %v644 = vsel %vm636, %v634, 0
        %646 = vmatpush.xpose.msra.mxu0 0.0
        %647 = vmatpush.xpose.msra.mxu0 0.0
        %648 = vmatpush.xpose.msra.mxu0 0.0
        %649 = vmatpush.xpose.msra.mxu0 0.0
        %650 = vmatpush.xpose.msra.mxu0 0.0
        %651 = vmatpush.xpose.msra.mxu0 0.0
        %652 = vmatpush.xpose.msra.mxu0 0.0
        %653 = vmatpush.xpose.msra.mxu0 0.0
        %654 = vmatpush.xpose.msra.mxu0 0.0
        %655 = vmatpush.xpose.msra.mxu0 0.0
        %656 = vmatpush.xpose.msra.mxu0 0.0
        %657 = vmatpush.xpose.msra.mxu0 0.0
        %658 = vmatpush.xpose.msra.mxu0 0.0
        %659 = vmatpush.xpose.msra.mxu0 0.0
        %660 = vmatpush.xpose.msra.mxu0 0.0
        %661 = vmatpush.xpose.msra.mxu0 %v644
        %662 = vmatmul.f32.gmra.mxu0 %v638
        %v663 = vpop.f32.mrf.mxu0
        %v664 = vadd.f32 0.0, %v663
        %665 = vmatmul.f32.gmra.mxu0 %v641
        %v666 = vpop.f32.mrf.mxu0
        %v667 = vadd.f32 0.0, %v666
        %668 = vdwg.mxu0
        %v669 = vmul.f32 %v664, 0.35355338
        %v670 = vmul.f32 %v667, 0.35355338
        %v671 = vsel %vm636, %v669, -inf
        %672 = vmax.xlane.f32.xlu0 %v671
        %v673 = vpop.xlane.xlu0 %672
        %v674 = vsel %vm636, %v670, -inf
        %675 = vmax.xlane.f32.xlu0 %v674
        %v676 = vpop.xlane.xlu0 %675
        %v677 = vsub.f32 %v669, %v673
        %v678 = vsub.f32 %v670, %v676
        %v679 = vmul.f32 %v677, 1.442695
        %v680 = vpow.pop %v679
        %v681 = vmul.f32 %v678, 1.442695
        %v682 = vpow.pop %v681
        %v683 = vsel %vm636, %v680, 0.0
        %684 = vadd.xlane.f32.xlu0 %v683
        %v685 = vpop.xlane.xlu0 %684
        %v686 = vsel %vm636, %v682, 0.0
        %687 = vadd.xlane.f32.xlu0 %v686
        %v688 = vpop.xlane.xlu0 %687
        %v689 = vrcp.pop %v685
        %v690 = vmul.f32 %v685, %v689
        %v691 = vsub.f32 1.0, %v690
        %v692 = vmul.f32 %v689, %v691
        %v693 = vadd.f32 %v689, %v692
        %vm694 = vweird.f32 %v685
        %vm695 = vweird.f32 %v689
        %vm696 = vmor %vm694, %vm695
        %v697 = vsel %vm696, %v689, %v693
        %v698 = vand.u32 2147483647, %v685
        %vm699 = vcmp.eq.f32.partialorder %v698, 8.507059e+37
        %v700 = vand.u32 %v685, 2147483648
        %v701 = vor.u32 1.1754944e-38, %v700
        %v702 = vsel %vm699, %v701, %v697
        %v703 = vmul.f32 %v680, %v702
        %v704 = vrcp.pop %v688
        %v705 = vmul.f32 %v688, %v704
        %v706 = vsub.f32 1.0, %v705
        %v707 = vmul.f32 %v704, %v706
        %v708 = vadd.f32 %v704, %v707
        %vm709 = vweird.f32 %v688
        %vm710 = vweird.f32 %v704
        %vm711 = vmor %vm709, %vm710
        %v712 = vsel %vm711, %v704, %v708
        %v713 = vand.u32 2147483647, %v688
        %vm714 = vcmp.eq.f32.partialorder %v713, 8.507059e+37
        %v715 = vand.u32 %v688, 2147483648
        %v716 = vor.u32 1.1754944e-38, %v715
        %v717 = vsel %vm714, %v716, %v712
        %v718 = vmul.f32 %v682, %v717
        %719 = vrot.lane.b32.xlu0 %v634, 112
        %v720 = vpop.permute.xlu0 %719
        %v723 = vsel %vm636, %v703, 0
        %v726 = vsel %vm636, %v718, 0
        %728 = vmatpush.msra.mxu0 0.0
        %729 = vmatpush.msra.mxu0 0.0
        %730 = vmatpush.msra.mxu0 0.0
        %731 = vmatpush.msra.mxu0 0.0
        %732 = vmatpush.msra.mxu0 0.0
        %733 = vmatpush.msra.mxu0 0.0
        %734 = vmatpush.msra.mxu0 0.0
        %735 = vmatpush.msra.mxu0 0.0
        %736 = vmatpush.msra.mxu0 0.0
        %737 = vmatpush.msra.mxu0 0.0
        %738 = vmatpush.msra.mxu0 0.0
        %739 = vmatpush.msra.mxu0 0.0
        %740 = vmatpush.msra.mxu0 0.0
        %741 = vmatpush.msra.mxu0 0.0
        %742 = vmatpush.msra.mxu0 0.0
        %743 = vmatpush.msra.mxu0 %v720
        %744 = vmatmul.f32.gmra.mxu0 %v723
        %v745 = vpop.f32.mrf.mxu0
        %v746 = vadd.f32 0.0, %v745
        %747 = vmatmul.f32.gmra.mxu0 %v726
        %v748 = vpop.f32.mrf.mxu0
        %v749 = vadd.f32 0.0, %v748
        %750 = vdwg.mxu0
        %751 = vrot.lane.b32.xlu0 %v602, 120
        %v752 = vpop.permute.xlu0 %751
        %753 = vrot.lane.b32.xlu0 %v605, 120
        %v754 = vpop.permute.xlu0 %753
        %755 = vrot.lane.b32.xlu0 %v634, 120
        %v756 = vpop.permute.xlu0 %755
        %v757 = vsel %vm636, %v752, 0
        %v759 = vsel %vm636, %v754, 0
        %v761 = vsel %vm636, %v756, 0
        %763 = vmatpush.xpose.msra.mxu0 0.0
        %764 = vmatpush.xpose.msra.mxu0 0.0
        %765 = vmatpush.xpose.msra.mxu0 0.0
        %766 = vmatpush.xpose.msra.mxu0 0.0
        %767 = vmatpush.xpose.msra.mxu0 0.0
        %768 = vmatpush.xpose.msra.mxu0 0.0
        %769 = vmatpush.xpose.msra.mxu0 0.0
        %770 = vmatpush.xpose.msra.mxu0 0.0
        %771 = vmatpush.xpose.msra.mxu0 0.0
        %772 = vmatpush.xpose.msra.mxu0 0.0
        %773 = vmatpush.xpose.msra.mxu0 0.0
        %774 = vmatpush.xpose.msra.mxu0 0.0
        %775 = vmatpush.xpose.msra.mxu0 0.0
        %776 = vmatpush.xpose.msra.mxu0 0.0
        %777 = vmatpush.xpose.msra.mxu0 0.0
        %778 = vmatpush.xpose.msra.mxu0 %v761
        %779 = vmatmul.f32.gmra.mxu0 %v757
        %v780 = vpop.f32.mrf.mxu0
        %v781 = vadd.f32 0.0, %v780
        %782 = vmatmul.f32.gmra.mxu0 %v759
        %v783 = vpop.f32.mrf.mxu0
        %v784 = vadd.f32 0.0, %v783
        %785 = vdwg.mxu0
        %v786 = vmul.f32 %v781, 0.35355338
        %v787 = vmul.f32 %v784, 0.35355338
        %v788 = vsel %vm636, %v786, -inf
        %789 = vmax.xlane.f32.xlu0 %v788
        %v790 = vpop.xlane.xlu0 %789
        %v791 = vsel %vm636, %v787, -inf
        %792 = vmax.xlane.f32.xlu0 %v791
        %v793 = vpop.xlane.xlu0 %792
        %v794 = vsub.f32 %v786, %v790
        %v795 = vsub.f32 %v787, %v793
        %v796 = vmul.f32 %v794, 1.442695
        %v797 = vpow.pop %v796
        %v798 = vmul.f32 %v795, 1.442695
        %v799 = vpow.pop %v798
        %v800 = vsel %vm636, %v797, 0.0
        %801 = vadd.xlane.f32.xlu0 %v800
        %v802 = vpop.xlane.xlu0 %801
        %v803 = vsel %vm636, %v799, 0.0
        %804 = vadd.xlane.f32.xlu0 %v803
        %v805 = vpop.xlane.xlu0 %804
        %v806 = vrcp.pop %v802
        %v807 = vmul.f32 %v802, %v806
        %v808 = vsub.f32 1.0, %v807
        %v809 = vmul.f32 %v806, %v808
        %v810 = vadd.f32 %v806, %v809
        %vm811 = vweird.f32 %v802
        %vm812 = vweird.f32 %v806
        %vm813 = vmor %vm811, %vm812
        %v814 = vsel %vm813, %v806, %v810
        %v815 = vand.u32 2147483647, %v802
        %vm816 = vcmp.eq.f32.partialorder %v815, 8.507059e+37
        %v817 = vand.u32 %v802, 2147483648
        %v818 = vor.u32 1.1754944e-38, %v817
        %v819 = vsel %vm816, %v818, %v814
        %v820 = vmul.f32 %v797, %v819
        %v821 = vrcp.pop %v805
        %v822 = vmul.f32 %v805, %v821
        %v823 = vsub.f32 1.0, %v822
        %v824 = vmul.f32 %v821, %v823
        %v825 = vadd.f32 %v821, %v824
        %vm826 = vweird.f32 %v805
        %vm827 = vweird.f32 %v821
        %vm828 = vmor %vm826, %vm827
        %v829 = vsel %vm828, %v821, %v825
        %v830 = vand.u32 2147483647, %v805
        %vm831 = vcmp.eq.f32.partialorder %v830, 8.507059e+37
        %v832 = vand.u32 %v805, 2147483648
        %v833 = vor.u32 1.1754944e-38, %v832
        %v834 = vsel %vm831, %v833, %v829
        %v835 = vmul.f32 %v799, %v834
        %836 = vrot.lane.b32.xlu0 %v634, 104
        %v837 = vpop.permute.xlu0 %836
        %v840 = vsel %vm636, %v820, 0
        %v843 = vsel %vm636, %v835, 0
        %845 = vmatpush.msra.mxu0 0.0
        %846 = vmatpush.msra.mxu0 0.0
        %847 = vmatpush.msra.mxu0 0.0
        %848 = vmatpush.msra.mxu0 0.0
        %849 = vmatpush.msra.mxu0 0.0
        %850 = vmatpush.msra.mxu0 0.0
        %851 = vmatpush.msra.mxu0 0.0
        %852 = vmatpush.msra.mxu0 0.0
        %853 = vmatpush.msra.mxu0 0.0
        %854 = vmatpush.msra.mxu0 0.0
        %855 = vmatpush.msra.mxu0 0.0
        %856 = vmatpush.msra.mxu0 0.0
        %857 = vmatpush.msra.mxu0 0.0
        %858 = vmatpush.msra.mxu0 0.0
        %859 = vmatpush.msra.mxu0 0.0
        %860 = vmatpush.msra.mxu0 %v837
        %861 = vmatmul.f32.gmra.mxu0 %v840
        %v862 = vpop.f32.mrf.mxu0
        %v863 = vadd.f32 0.0, %v862
        %864 = vmatmul.f32.gmra.mxu0 %v843
        %v865 = vpop.f32.mrf.mxu0
        %v866 = vadd.f32 0.0, %v865
        %867 = vdwg.mxu0
        %870 = vrot.lane.b32.xlu0 %v863, 8
        %v871 = vpop.permute.xlu0 %870
        %872 = vrot.lane.b32.xlu0 %v866, 8
        %v873 = vpop.permute.xlu0 %872
        %v876 = vsel %vm636, %v746, %v871
        %v877 = vsel %vm636, %v749, %v873
        %v878 = vld [vmem:[#allocation5] sm:$0xff]
        %v879 = vld [vmem:[#allocation5 + $0x8] sm:$0xff]
        %v880 = vld [vmem:[%s10] sm:$0x1]
        %v882 = vperm.slane %v880, 0
        %v885 = vsel %vm534, %v876, 0
        %v888 = vsel %vm534, %v877, 0
        %890 = vmatpush.msra.mxu0 0.0
        %891 = vmatpush.msra.mxu0 0.0
        %892 = vmatpush.msra.mxu0 0.0
        %893 = vmatpush.msra.mxu0 0.0
        %894 = vmatpush.msra.mxu0 0.0
        %895 = vmatpush.msra.mxu0 0.0
        %896 = vmatpush.msra.mxu0 0.0
        %897 = vmatpush.msra.mxu0 0.0
        %898 = vmatpush.msra.mxu0 0.0
        %899 = vmatpush.msra.mxu0 0.0
        %900 = vmatpush.msra.mxu0 0.0
        %901 = vmatpush.msra.mxu0 0.0
        %902 = vmatpush.msra.mxu0 0.0
        %903 = vmatpush.msra.mxu0 0.0
        %904 = vmatpush.msra.mxu0 %v879
        %905 = vmatpush.msra.mxu0 %v878
        %906 = vmatmul.f32.gmra.mxu0 %v885
        %v907 = vpop.f32.mrf.mxu0
        %v908 = vadd.f32 %v882, %v907
        %909 = vmatmul.f32.gmra.mxu0 %v888
        %v910 = vpop.f32.mrf.mxu0
        %v911 = vadd.f32 %v882, %v910
        %912 = vdwg.mxu0
        %v913 = vadd.f32 %v532, %v908
        %v914 = vadd.f32 %v533, %v911
        %915 = vst.msk [vmem:[%s451] sm:$0xff] %vm470, %v913
        %916 = vst.msk [vmem:[%s451 + $0x8] sm:$0xff] %vm470, %v914
        %s917 = sand.u32 %s292, 1
        %s918 = scalar_lea.sflag [#allocation4], %s917
        %s919 = sand.u32 %s292, 1
        %s920 = smul.addr %s919, 16
        %s921 = scalar_lea.vmem [#allocation7], %s920
        // Predicated region
        $region73: #{tpu_custom_call.1} parent=63 // pred_check
          %p922 = pneg %p302
        $region74: #{tpu_custom_call.1} parent=63 // pred_check_branch
          %924 = sbr.rel (%p922) target = $region76
        $region75: #{tpu_custom_call.1} parent=63 // pred_region
          %s925 = smul.u32 2, %s32
          %927 = vsyncadd %s918, 0
          %s928 = smul.addr %s31, 2
          %s929 = sadd.s32 %s925, %s928
          %s930 = smul.addr %s929, 8
          %s931 = scalar_lea.hbm %s11, %s930
          %s932 = sshll.u32 %s921, 4
          %s933 = int_to_ptr.vmem [resolvable:$true] %s932
          %s934 = sshll.u32 %s931, 4
          %s935 = int_to_ptr.hbm [resolvable:$true] %s934
          %940 = dma.vmem_to_hbm [thread:$0]  %s933, 256, %s935, %s918, 128, 128, 8
        $region76: #{tpu_custom_call.1} parent=63 // pred_fallthru
          _
      $region64: #{tpu_custom_call.1} parent=5 // pred_fallthru
        _
      %p941 = scmp.le.s32.totalorder 2, %s22
      // Predicated region
      $region77: #{tpu_custom_call.1} parent=5 // pred_check
        %p942 = pneg %p941
      $region78: #{tpu_custom_call.1} parent=5 // pred_check_branch
        %944 = sbr.rel (%p942) target = $region80
      $region79: #{tpu_custom_call.1} parent=5 // pred_region
        %s945 = ssub.s32 %s22, 2
        // Predicated region
        $region81: #{tpu_custom_call.1} parent=79 // pred_check
          %p946 = pneg %p308
        $region82: #{tpu_custom_call.1} parent=79 // pred_check_branch
          %948 = sbr.rel (%p946) target = $region84
        $region83: #{tpu_custom_call.1} parent=79 // pred_region
          %s949 = sand.u32 %s293, 1
          %s950 = scalar_lea.sflag [#allocation4], %s949
          %s951 = sand.u32 %s293, 1
          %s952 = smul.addr %s951, 16
          %s953 = scalar_lea.vmem [#allocation7], %s952
          %955 = dma.done %s950, 256
        $region84: #{tpu_custom_call.1} parent=79 // pred_fallthru
          _
      $region80: #{tpu_custom_call.1} parent=5 // pred_fallthru
        _
    $region6: #{tpu_custom_call.1} parent=1 // loop_footer
      %s26 = sadd.s32 1, %s22
    $region7: #{tpu_custom_call.1} parent=1 // loop_footer_branch
      %21 = sbr.rel target = $region3
    $region8: #{tpu_custom_call.1} parent=1 // loop_exit
      _
    %956 = vsyncpa [#allocation3], 1
    %s957 = scalar_lea.sflag [#allocation3], 1
    %958 = vsyncpa %s957, 1
    %959 = vsyncpa [#allocation6], 1
    %960 = vsyncpa [#allocation4], 1
    %s961 = scalar_lea.sflag [#allocation4], 1
    %962 = vsyncpa %s961, 1

</llo_original>
